<compile_context>
chip_gen: v6e
topology: v6e:2x2x1
jax: 0.10.0
libtpu: 0.0.40
codegen_flags: <defaults>
</compile_context>

<pallas_src>
import math

import jax
import jax.numpy as jnp
from jax.experimental import pallas as pl
from jax.experimental.pallas import tpu as pltpu


def _drop_path_kernel(scale_ref, x_ref, o_ref):
    """scale_ref: (TB, 1), x.dtype, holding 0 or 1/keep_prob; x/o: (TB, TILE_N)."""
    o_ref[...] = x_ref[...] * scale_ref[...]


def _round_up(a: int, b: int) -> int:
    return (a + b - 1) // b * b


def drop_path(x, drop_prob, *, training: bool, key=None, seed: int = 0,
              donate: bool = False):
    """DropPath forward. x: (B, ...). Returns same shape/dtype as x."""
    if drop_prob is None or float(drop_prob) == 0.0 or not training:
        return x

    keep_prob = 1.0 - float(drop_prob)
    B = x.shape[0]
    N = math.prod(x.shape[1:])
    orig_shape = x.shape
    x2 = x.reshape(B, N)

    # --- per-sample keep/scale, computed once outside the kernel ------------
    # torch: random_tensor = floor(keep_prob + U[0,1))  -> 1 w.p. keep_prob
    if key is None:
        key = jax.random.PRNGKey(seed)
    u = jax.random.uniform(key, (B,), dtype=jnp.float32)
    keep = jnp.floor(jnp.float32(keep_prob) + u)
    scale = (keep * jnp.float32(1.0 / keep_prob)).reshape(B, 1).astype(x.dtype)

    # --- generation-aware block budget ---------------------------------------
    LANE = 128
    SUB = 8
    itemsize = jnp.dtype(x.dtype).itemsize
    try:
        vmem_cap = int(pltpu.get_tpu_info().vmem_capacity_bytes)
    except Exception:
        vmem_cap = 64 * 1024 * 1024  # conservative: v7x per-TC VMEM
    # One input block + one output block, each double-buffered => ~4x budget
    # resident; keep that well inside the scoped limit requested below.
    block_budget = min(8 * 1024 * 1024, max(2 * 1024 * 1024, vmem_cap // 16))
    vmem_limit = min(vmem_cap - 8 * 1024 * 1024, 6 * block_budget)

    # --- tiling (no padding; ragged last blocks are boundary-masked) --------
    N_lanes = _round_up(N, LANE)           # lane-padded row width (for sizing)
    row_bytes = N_lanes * itemsize
    if row_bytes >= block_budget:
        # Wide rows: 8 sublanes per block, tile along N.
        TB = SUB
        TILE_N = max(LANE, (block_budget // (TB * itemsize)) // LANE * LANE)
        TILE_N = min(TILE_N, N_lanes)
    else:
        # Whole row fits in one block: widen TB (multiple of 8) to fill budget.
        TILE_N = N_lanes
        TB = (block_budget // row_bytes) // SUB * SUB
        TB = max(SUB, min(TB, _round_up(B, SUB)))

    grid_b = pl.cdiv(B, TB)
    grid_n = pl.cdiv(N, TILE_N)

    # Give v7x's two TensorCores something to shard if the grid collapsed.
    if grid_b * grid_n == 1:
        if B > SUB:
            TB = _round_up(pl.cdiv(B, 2), SUB)
            grid_b = pl.cdiv(B, TB)
        elif N > LANE:
            TILE_N = _round_up(pl.cdiv(N, 2), LANE)
            grid_n = pl.cdiv(N, TILE_N)

    extra = {}
    if donate:
        # Output aliases x2 (input index 1).  Only a win when x is donated at
        # the jit boundary; otherwise XLA inserts a defensive copy.
        extra["input_output_aliases"] = {1: 0}

    out2 = pl.pallas_call(
        _drop_path_kernel,
        out_shape=jax.ShapeDtypeStruct((B, N), x.dtype),
        grid=(grid_b, grid_n),
        in_specs=[
            pl.BlockSpec((TB, 1), lambda ib, jn: (ib, 0)),
            pl.BlockSpec((TB, TILE_N), lambda ib, jn: (ib, jn)),
        ],
        out_specs=pl.BlockSpec((TB, TILE_N), lambda ib, jn: (ib, jn)),
        compiler_params=pltpu.CompilerParams(
            dimension_semantics=("parallel", "parallel"),
            vmem_limit_bytes=int(vmem_limit),
        ),
        **extra,
    )(scale, x2)

    return out2.reshape(orig_shape)


if __name__ == "__main__":
    key = jax.random.PRNGKey(0)
    B, C, H, W = 2, 4, 16, 16
    x = jax.random.normal(key, (B, C, H, W), dtype=jnp.float32)

    drop_prob = 0.2
    out = jax.block_until_ready(
        drop_path(x, drop_prob, training=True, key=jax.random.PRNGKey(1234)))

    # Sanity: each sample must be either all-zero or exactly x / keep_prob.
    keep_prob = 1.0 - drop_prob
    scaled = x / keep_prob
    for b in range(B):
        ob = out[b]
        is_zero = bool(jnp.all(jnp.abs(ob) < 1e-6))
        is_scaled = bool(jnp.allclose(ob, scaled[b], atol=1e-5, rtol=1e-5))
        assert is_zero or is_scaled, f"sample {b}: not a valid drop-path output"

    # Eval / drop_prob=0 path returns input unchanged.
    out_eval = jax.block_until_ready(drop_path(x, drop_prob, training=False))
    assert bool(jnp.array_equal(out_eval, x))

    # Ragged shape (B not multiple of 8, N not multiple of 128) exercises the
    # no-pad boundary-masked path.
    xr = jax.random.normal(key, (3, 5, 7, 9), dtype=jnp.float32)
    outr = jax.block_until_ready(
        drop_path(xr, 0.5, training=True, key=jax.random.PRNGKey(7)))
    for b in range(xr.shape[0]):
        ob = outr[b]
        ok = bool(jnp.all(jnp.abs(ob) < 1e-6)) or bool(
            jnp.allclose(ob, xr[b] / 0.5, atol=1e-5, rtol=1e-5))
        assert ok, f"ragged sample {b}: not a valid drop-path output"

    print("KERNEL_OK")
</pallas_src>

<mosaic_0001>
module attributes {stable_mosaic.version = 11 : i64} {
  func.func @_drop_path_kernel(%arg0: i32, %arg1: i32, %arg2: memref<8x1xf32, #tpu.memory_space<vmem>>, %arg3: memref<8x512xf32, #tpu.memory_space<vmem>>, %arg4: memref<8x512xf32, #tpu.memory_space<vmem>>) attributes {dimension_semantics = [#tpu.dimension_semantics<parallel>, #tpu.dimension_semantics<parallel>], iteration_bounds = array<i64: 1, 2>, scalar_prefetch = 0 : i64, scratch_operands = 0 : i64, tpu.core_type = #tpu.core_type<tc>, window_params = [{transform_indices = @transform_0, window_bounds = array<i64: 8, 1>}, {transform_indices = @transform_1, window_bounds = array<i64: 8, 512>}, {transform_indices = @transform_2, window_bounds = array<i64: 8, 512>}]} {
    %c0 = arith.constant 0 : index
    %c0_0 = arith.constant 0 : index
    %0 = vector.load %arg3[%c0, %c0_0] : memref<8x512xf32, #tpu.memory_space<vmem>>, vector<8x512xf32>
    %c0_1 = arith.constant 0 : index
    %c0_2 = arith.constant 0 : index
    %1 = vector.load %arg2[%c0_1, %c0_2] : memref<8x1xf32, #tpu.memory_space<vmem>>, vector<8x1xf32>
    %2 = vector.broadcast %1 : vector<8x1xf32> to vector<8x512xf32>
    %3 = arith.mulf %0, %2 : vector<8x512xf32>
    %c0_3 = arith.constant 0 : index
    %c0_4 = arith.constant 0 : index
    %4 = vector.load %arg4[%c0_3, %c0_4] : memref<8x512xf32, #tpu.memory_space<vmem>>, vector<8x512xf32>
    tpu.vector_store %arg4[%c0_3, %c0_4], %3 {strides = array<i32>} : memref<8x512xf32, #tpu.memory_space<vmem>>, vector<8x512xf32>,
    return
  }
  func.func @transform_0(%arg0: i32, %arg1: i32) -> (i32, i32) {
    %c0_i32 = arith.constant 0 : i32
    %c0_i32_0 = arith.constant 0 : i32
    return %arg0, %c0_i32 : i32, i32
  }
  func.func @transform_1(%arg0: i32, %arg1: i32) -> (i32, i32) {
    %c0_i32 = arith.constant 0 : i32
    return %arg0, %arg1 : i32, i32
  }
  func.func @transform_2(%arg0: i32, %arg1: i32) -> (i32, i32) {
    %c0_i32 = arith.constant 0 : i32
    return %arg0, %arg1 : i32, i32
  }
}

</mosaic_0001>

<llo_original>
// kernel: tpu_custom_call.1
$region0: #{tpu_custom_call.1}
  #allocation0 [shape = 'u32[]', space=smem, size = 0x4, offset = 0x4, fixed_abs, tag = 'smem constant byte address 0x4 - core index']
  #allocation1 [shape = 'u32[144,128]{1,0:T(1,128)}', space=vmem, size = 0x12000, scoped, tag = 'internal scratch']
  %s0 = inlined_call_operand.vmem [shape: f32[2,1], index: 0, kind: input, shape index: {}]
  %s1 = inlined_call_operand.hbm [shape: f32[2,1024], index: 1, kind: input, shape index: {}]
  %s2 = inlined_call_operand.hbm [shape: f32[2,1024], index: 2, kind: output, shape index: {}]
  %s3 = sld [smem:[#allocation0]]
  $region45: #{tpu_custom_call.1} parent=0
    _
  %s5 = ssub.s32 1, %s3
  %s6 = scalar_select 0, %s5, %s3
  $region1: #{tpu_custom_call.1} parent=0
    #allocation2 [shape = 'u8[32768]{0}', space=vmem, size = 0x8000, scoped, tag = 'input window, operand 1']
    #allocation3 [shape = 's32[2]{0}', space=sflag, size = 0x8, scoped, tag = 'scoped memory for tpu_custom_call.1']
    #allocation4 [shape = 's32[2]{0}', space=sflag, size = 0x8, scoped, tag = 'scoped memory for tpu_custom_call.1']
    #allocation5 [shape = 'u8[32768]{0}', space=vmem, size = 0x8000, scoped, tag = 'output window, operand 0']
    %7 = vsyncpa [#allocation3], 0
    %s8 = scalar_lea.sflag [#allocation3], 1
    %9 = vsyncpa %s8, 0
    %10 = vsyncpa [#allocation4], 0
    %s11 = scalar_lea.sflag [#allocation4], 1
    %12 = vsyncpa %s11, 0
    loop: start=0, step=1, limit=4
    $region2: #{tpu_custom_call.1} parent=1 // loop_pre_header
      _
    $region3: #{tpu_custom_call.1} parent=1 // loop_header
      %s14 = sphi 0, %s18
      %p15 = scmp.ge.s32.totalorder %s14, 4
      %s21 = sphi 0, %s33
      %s22 = sphi 0, %s29
      %s23 = sphi 0, %s21
      %s24 = sphi 0, %s22
      %s25 = sphi 0, %s23
      %s26 = sphi 0, %s24
      %s36 = sphi 0, %s38
      %s39 = sphi 0, %s36
      %s40 = sphi 0, %s39
      %s56 = sphi 0, %s40
      %s64 = sphi 0, %s66
      %s67 = sphi 0, %s64
      %s68 = sphi 0, %s67
      %s84 = sphi 0, %s68
      %s92 = sphi 0, %s94
      %s95 = sphi 0, %s92
      %s96 = sphi 0, %s95
      %s112 = sphi 0, %s96
    $region4: #{tpu_custom_call.1} parent=1 // loop_header_branch
      %17 = sbr.rel (%p15) target = $region8
    $region5: #{tpu_custom_call.1} parent=1 // loop_body
      %s19 = ssub.s32 %s14, 1
      %s20 = ssub.s32 %s14, 2
      %s27 = sadd.s32 1, %s22
      %p28 = scmp.ge.s32.totalorder %s27, 2
      %s29 = scalar_select %p28, 0, %s27
      %s30 = sadd.s32 1, %s21
      %s31 = scalar_select %p28, %s30, %s21
      %p32 = scmp.ge.s32.totalorder %s31, 1
      %s33 = scalar_select %p32, 0, %s31
      %s34 = ssub.s32 %s21, %s33
      %p35 = scmp.eq.s32.totalorder %s34, 0
      %s37 = sadd.s32 %s36, 1
      %s38 = scalar_select %p35, %s36, %s37
      %p41 = pneg %p35
      %p42 = scmp.eq.s32.totalorder %s14, 1
      %p43 = por %p41, %p42
      %p44 = scmp.ne.s32.totalorder %s36, %s39
      %p45 = scmp.eq.s32.totalorder %s14, 0
      %p46 = por %p44, %p45
      %p47 = scmp.ne.s32.totalorder %s36, %s39
      %p48 = scmp.eq.s32.totalorder %s19, 1
      %p49 = por %p47, %p48
      %p50 = scmp.ne.s32.totalorder %s39, %s40
      %p51 = scmp.eq.s32.totalorder %s19, 0
      %p52 = por %p50, %p51
      %p53 = scmp.ne.s32.totalorder %s39, %s40
      %p54 = scmp.eq.s32.totalorder %s20, 1
      %p55 = por %p53, %p54
      %p57 = scmp.ne.s32.totalorder %s40, %s56
      %p58 = scmp.eq.s32.totalorder %s20, 0
      %p59 = por %p57, %p58
      %s60 = ssub.s32 %s21, %s33
      %s61 = ssub.s32 %s22, %s29
      %s62 = sor.u32 %s60, %s61
      %p63 = scmp.eq.s32.totalorder %s62, 0
      %s65 = sadd.s32 %s64, 1
      %s66 = scalar_select %p63, %s64, %s65
      %p69 = pneg %p63
      %p70 = scmp.eq.s32.totalorder %s14, 1
      %p71 = por %p69, %p70
      %p72 = scmp.ne.s32.totalorder %s64, %s67
      %p73 = scmp.eq.s32.totalorder %s14, 0
      %p74 = por %p72, %p73
      %p75 = scmp.ne.s32.totalorder %s64, %s67
      %p76 = scmp.eq.s32.totalorder %s19, 1
      %p77 = por %p75, %p76
      %p78 = scmp.ne.s32.totalorder %s67, %s68
      %p79 = scmp.eq.s32.totalorder %s19, 0
      %p80 = por %p78, %p79
      %p81 = scmp.ne.s32.totalorder %s67, %s68
      %p82 = scmp.eq.s32.totalorder %s20, 1
      %p83 = por %p81, %p82
      %p85 = scmp.ne.s32.totalorder %s68, %s84
      %p86 = scmp.eq.s32.totalorder %s20, 0
      %p87 = por %p85, %p86
      %s88 = ssub.s32 %s21, %s33
      %s89 = ssub.s32 %s22, %s29
      %s90 = sor.u32 %s88, %s89
      %p91 = scmp.eq.s32.totalorder %s90, 0
      %s93 = sadd.s32 %s92, 1
      %s94 = scalar_select %p91, %s92, %s93
      %p97 = pneg %p91
      %p98 = scmp.eq.s32.totalorder %s14, 1
      %p99 = por %p97, %p98
      %p100 = scmp.ne.s32.totalorder %s92, %s95
      %p101 = scmp.eq.s32.totalorder %s14, 0
      %p102 = por %p100, %p101
      %p103 = scmp.ne.s32.totalorder %s92, %s95
      %p104 = scmp.eq.s32.totalorder %s19, 1
      %p105 = por %p103, %p104
      %p106 = scmp.ne.s32.totalorder %s95, %s96
      %p107 = scmp.eq.s32.totalorder %s19, 0
      %p108 = por %p106, %p107
      %p109 = scmp.ne.s32.totalorder %s95, %s96
      %p110 = scmp.eq.s32.totalorder %s20, 1
      %p111 = por %p109, %p110
      %p113 = scmp.ne.s32.totalorder %s96, %s112
      %p114 = scmp.eq.s32.totalorder %s20, 0
      %p115 = por %p113, %p114
      %p116 = scmp.le.s32.totalorder 1, %s14
      %p117 = scmp.lt.s32.totalorder %s14, 3
      %p118 = pnand %p116, %p117
      %p119 = pneg %p118
      // Predicated region
      $region9: #{tpu_custom_call.1} parent=5 // pred_check
        _
      $region10: #{tpu_custom_call.1} parent=5 // pred_check_branch
        %121 = sbr.rel (%p118) target = $region12
      $region11: #{tpu_custom_call.1} parent=5 // pred_region
        %s122 = ssub.s32 %s14, 1
        // Predicated region
        $region13: #{tpu_custom_call.1} parent=11 // pred_check
          %p123 = pneg %p52
        $region14: #{tpu_custom_call.1} parent=11 // pred_check_branch
          %125 = sbr.rel (%p123) target = $region16
        $region15: #{tpu_custom_call.1} parent=11 // pred_region
          %s126 = smul.u32 4, %s23
          %s127 = ssub.s32 1, %s126
          %s128 = smul.u32 32, %s127
          %p129 = scmp.lt.s32.totalorder %s126, 0
          %s130 = scalar_select %p129, %s126, 0
          %s131 = smul.addr %s130, 2
          %s132 = scalar_lea.vmem %s0, %s131
          %s133 = smul.u32 4, %s23
          %s134 = ssub.s32 1, %s133
          %s135 = smul.u32 32, %s134
        $region16: #{tpu_custom_call.1} parent=11 // pred_fallthru
          _
      $region12: #{tpu_custom_call.1} parent=5 // pred_fallthru
        _
      %p136 = scmp.lt.s32.totalorder %s14, 2
      // Predicated region
      $region17: #{tpu_custom_call.1} parent=5 // pred_check
        %p137 = pneg %p136
      $region18: #{tpu_custom_call.1} parent=5 // pred_check_branch
        %139 = sbr.rel (%p137) target = $region20
      $region19: #{tpu_custom_call.1} parent=5 // pred_region
        // Predicated region
        $region21: #{tpu_custom_call.1} parent=19 // pred_check
          %p140 = pneg %p74
        $region22: #{tpu_custom_call.1} parent=19 // pred_check_branch
          %142 = sbr.rel (%p140) target = $region24
        $region23: #{tpu_custom_call.1} parent=19 // pred_region
          %s143 = sand.u32 %s64, 1
          %s144 = scalar_lea.sflag [#allocation3], %s143
          %s145 = sand.u32 %s64, 1
          %s146 = smul.addr %s145, 32
          %s147 = scalar_lea.vmem [#allocation2], %s146
          %s148 = smul.u32 4, %s21
          %s149 = smul.u32 4, %s22
          %s150 = ssub.s32 1, %s148
          %s151 = smul.u32 32, %s150
          %s152 = smul.u32 %s151, 4
          %s154 = ssub.s32 512, %s152
          %155 = vsyncadd %s144, %s154
          %p156 = scmp.ne.s32.totalorder 0, %s152
          %s157 = smul.addr %s148, 8
          %s158 = sadd.s32 %s149, %s157
          %s159 = smul.addr %s158, 32
          %s160 = scalar_lea.hbm %s1, %s159
          %s161 = smul.u32 8, %s150
          %s162 = sshll.u32 %s147, 4
          %s163 = int_to_ptr.vmem [resolvable:$true] %s162
          %s164 = sshll.u32 %s161, 4
          %168 = dma.hbm_to_vmem [thread:$0]  (%p156), %s160, %s164, %s163, %s144, 256, 128, 8
        $region24: #{tpu_custom_call.1} parent=19 // pred_fallthru
          _
      $region20: #{tpu_custom_call.1} parent=5 // pred_fallthru
        _
      %p169 = scmp.le.s32.totalorder 1, %s14
      %p170 = scmp.lt.s32.totalorder %s14, 3
      %p171 = pnand %p169, %p170
      %p172 = pneg %p171
      // Predicated region
      $region25: #{tpu_custom_call.1} parent=5 // pred_check
        _
      $region26: #{tpu_custom_call.1} parent=5 // pred_check_branch
        %174 = sbr.rel (%p171) target = $region28
      $region27: #{tpu_custom_call.1} parent=5 // pred_region
        %s175 = ssub.s32 %s14, 1
        %s176 = sand.u32 %s67, 1
        %s177 = scalar_lea.sflag [#allocation3], %s176
        %s178 = sand.u32 %s67, 1
        %s179 = smul.addr %s178, 32
        %s180 = scalar_lea.vmem [#allocation2], %s179
        // Predicated region
        $region29: #{tpu_custom_call.1} parent=27 // pred_check
          %p181 = pneg %p80
        $region30: #{tpu_custom_call.1} parent=27 // pred_check_branch
          %183 = sbr.rel (%p181) target = $region32
        $region31: #{tpu_custom_call.1} parent=27 // pred_region
          %184 = dma.done %s177, 512
        $region32: #{tpu_custom_call.1} parent=27 // pred_fallthru
          _
        %s185 = smul.u32 4, %s23
        %s186 = ssub.s32 1, %s185
        %s187 = smul.u32 32, %s186
        %p188 = scmp.lt.s32.totalorder %s185, 0
        %s189 = scalar_select %p188, %s185, 0
        %s190 = smul.addr %s189, 2
        %s191 = scalar_lea.vmem %s0, %s190
        %p192 = pneg %p52
        %p193 = pneg %p49
        %s194 = sand.u32 %s67, 1
        %s195 = scalar_lea.sflag [#allocation3], %s194
        %s196 = sand.u32 %s67, 1
        %s197 = smul.addr %s196, 32
        %s198 = scalar_lea.vmem [#allocation2], %s197
        %p199 = pneg %p80
        %p200 = pneg %p77
        %p201 = pneg %p108
        %p202 = pneg %p105
        %s203 = sand.u32 %s95, 1
        %s204 = scalar_lea.sflag [#allocation4], %s203
        %s205 = sand.u32 %s95, 1
        %s206 = smul.addr %s205, 32
        %s207 = scalar_lea.vmem [#allocation5], %s206
        %s208 = smul.u32 4, %s23
        %s209 = ssub.s32 1, %s208
        %s210 = smul.u32 32, %s209
        %p211 = scmp.lt.s32.totalorder %s208, 0
        %s212 = scalar_select %p211, %s208, 0
        %s213 = smul.addr %s212, 2
        %s214 = scalar_lea.vmem %s0, %s213
        %s215 = smul.u32 4, %s23
        %s216 = ssub.s32 1, %s215
        %s217 = smul.u32 32, %s216
        %s218 = smul.u32 4, %s23
        %s219 = smul.u32 4, %s24
        %s220 = ssub.s32 1, %s218
        %s221 = smul.u32 32, %s220
        %s222 = smul.u32 %s221, 4
        %s223 = smul.u32 4, %s23
        %s224 = smul.u32 4, %s24
        %s225 = ssub.s32 1, %s223
        %s226 = smul.u32 32, %s225
        %s227 = smul.u32 %s226, 4
        %v228 = vld [vmem:[%s180] sm:$0xff]
        %v229 = vld [vmem:[%s180 + $0x8] sm:$0xff]
        %v230 = vld [vmem:[%s180 + $0x10] sm:$0xff]
        %v231 = vld [vmem:[%s180 + $0x18] sm:$0xff]
        %v232 = vld [vmem:[%s214] sm:$0xff]
        %234 = vset.pattern.permute.xlu0 0
        %235 = vperm.xlu0 %234, %v232
        %v236 = vpop.permute.xlu0 %235
        %v238 = vunpack.c.l.s4 269488144
        %v239 = vunpack.c.0.s8 %v238
        %v240 = vlaneseq
        %v241 = vshrl.u32 %v240, 7
        %v242 = vsub.s32 %v239, %v241
        %v243 = vrot.slane %v236, %v242
        %v245 = vunpack.c.l.s4 842150450
        %v246 = vunpack.c.0.s8 %v245
        %v247 = vlaneseq
        %v248 = vshrl.u32 %v247, 7
        %v249 = vsub.s32 %v246, %v248
        %v250 = vrot.slane %v236, %v249
        %v252 = vunpack.c.l.s4 1414812756
        %v253 = vunpack.c.0.s8 %v252
        %v254 = vlaneseq
        %v255 = vshrl.u32 %v254, 7
        %v256 = vsub.s32 %v253, %v255
        %v257 = vrot.slane %v236, %v256
        %v259 = vunpack.c.l.s4 1987475062
        %v260 = vunpack.c.0.s8 %v259
        %v261 = vlaneseq
        %v262 = vshrl.u32 %v261, 7
        %v263 = vsub.s32 %v260, %v262
        %v264 = vrot.slane %v236, %v263
        %v269 = vmul.f32 %v228, %v243
        %v270 = vmul.f32 %v229, %v250
        %v271 = vmul.f32 %v230, %v257
        %v272 = vmul.f32 %v231, %v264
        %273 = vst [vmem:[%s207] sm:$0xff] %v269
        %274 = vst [vmem:[%s207 + $0x8] sm:$0xff] %v270
        %275 = vst [vmem:[%s207 + $0x10] sm:$0xff] %v271
        %276 = vst [vmem:[%s207 + $0x18] sm:$0xff] %v272
        %s277 = sand.u32 %s95, 1
        %s278 = scalar_lea.sflag [#allocation4], %s277
        %s279 = sand.u32 %s95, 1
        %s280 = smul.addr %s279, 32
        %s281 = scalar_lea.vmem [#allocation5], %s280
        // Predicated region
        $region33: #{tpu_custom_call.1} parent=27 // pred_check
          %p282 = pneg %p105
        $region34: #{tpu_custom_call.1} parent=27 // pred_check_branch
          %284 = sbr.rel (%p282) target = $region36
        $region35: #{tpu_custom_call.1} parent=27 // pred_region
          %s285 = smul.u32 4, %s23
          %s286 = smul.u32 4, %s24
          %s287 = ssub.s32 1, %s285
          %s288 = smul.u32 32, %s287
          %s289 = smul.u32 %s288, 4
          %s291 = ssub.s32 512, %s289
          %292 = vsyncadd %s278, %s291
          %p293 = scmp.ne.s32.totalorder 0, %s289
          %s294 = smul.addr %s285, 8
          %s295 = sadd.s32 %s286, %s294
          %s296 = smul.addr %s295, 32
          %s297 = scalar_lea.hbm %s2, %s296
          %s298 = smul.u32 8, %s287
          %s299 = sshll.u32 %s281, 4
          %s300 = int_to_ptr.vmem [resolvable:$true] %s299
          %s301 = sshll.u32 %s298, 4
          %305 = dma.vmem_to_hbm [thread:$0]  (%p293), %s300, %s301, %s297, %s278, 128, 256, 8
        $region36: #{tpu_custom_call.1} parent=27 // pred_fallthru
          _
      $region28: #{tpu_custom_call.1} parent=5 // pred_fallthru
        _
      %p306 = scmp.le.s32.totalorder 2, %s14
      // Predicated region
      $region37: #{tpu_custom_call.1} parent=5 // pred_check
        %p307 = pneg %p306
      $region38: #{tpu_custom_call.1} parent=5 // pred_check_branch
        %309 = sbr.rel (%p307) target = $region40
      $region39: #{tpu_custom_call.1} parent=5 // pred_region
        %s310 = ssub.s32 %s14, 2
        // Predicated region
        $region41: #{tpu_custom_call.1} parent=39 // pred_check
          %p311 = pneg %p111
        $region42: #{tpu_custom_call.1} parent=39 // pred_check_branch
          %313 = sbr.rel (%p311) target = $region44
        $region43: #{tpu_custom_call.1} parent=39 // pred_region
          %s314 = sand.u32 %s96, 1
          %s315 = scalar_lea.sflag [#allocation4], %s314
          %s316 = sand.u32 %s96, 1
          %s317 = smul.addr %s316, 32
          %s318 = scalar_lea.vmem [#allocation5], %s317
          %319 = dma.done %s315, 512
        $region44: #{tpu_custom_call.1} parent=39 // pred_fallthru
          _
      $region40: #{tpu_custom_call.1} parent=5 // pred_fallthru
        _
    $region6: #{tpu_custom_call.1} parent=1 // loop_footer
      %s18 = sadd.s32 1, %s14
    $region7: #{tpu_custom_call.1} parent=1 // loop_footer_branch
      %13 = sbr.rel target = $region3
    $region8: #{tpu_custom_call.1} parent=1 // loop_exit
      _
    %320 = vsyncpa [#allocation3], 1
    %s321 = scalar_lea.sflag [#allocation3], 1
    %322 = vsyncpa %s321, 1
    %323 = vsyncpa [#allocation4], 1
    %s324 = scalar_lea.sflag [#allocation4], 1
    %325 = vsyncpa %s324, 1

</llo_original>
